<compile_context>
chip_gen: v7x
topology: tpu7x:2x2x1
jax: 0.10.0
libtpu: 0.0.40
codegen_flags: <defaults>
</compile_context>

<pallas_src>
import functools

import jax
import jax.numpy as jnp
from jax.experimental import pallas as pl
from jax.experimental.pallas import tpu as pltpu

HID1 = 400
HID2 = 300
LANE = 128


def _round_up(n, m):
    return (n + m - 1) // m * m


def actor_kernel(x_ref, w1_ref, b1_ref, w2_ref, b2_ref, w3_ref, b3_ref,
                 o_ref, *, action_bound):
    # x_ref: (TB, S_pad) bf16; weights bf16; biases f32; o_ref: (TB, ACT_P) f32.
    x = x_ref[...]

    h1 = jnp.dot(x, w1_ref[...], preferred_element_type=jnp.float32) + b1_ref[...]
    h1 = jnp.maximum(h1, 0.0).astype(jnp.bfloat16)          # relu (VPU), bf16 for MXU

    h2 = jnp.dot(h1, w2_ref[...], preferred_element_type=jnp.float32) + b2_ref[...]
    h2 = jnp.maximum(h2, 0.0).astype(jnp.bfloat16)

    h3 = jnp.dot(h2, w3_ref[...], preferred_element_type=jnp.float32) + b3_ref[...]

    o_ref[...] = (jnp.tanh(h3) * action_bound).astype(o_ref.dtype)  # tanh (EUP) + scale


def actor_forward(x, params, action_bound, action_dim, *, batch_tile=None):
    """x: (B, state_dim) f32. params: padded bf16 weights / f32 biases
    (see init_params). Returns (B, action_dim) f32 actions."""
    w1, b1, w2, b2, w3, b3 = params
    B, S = x.shape
    s_pad, h1_p = w1.shape
    h2_p = w2.shape[1]
    act_p = w3.shape[1]

    if batch_tile is None:
        # Big tiles amortize per-grid-step overhead; small batches just get
        # rounded up to a bf16-sublane-friendly multiple of 16.
        batch_tile = 512 if B >= 512 else _round_up(B, 16)
    b_pad = _round_up(B, batch_tile)

    # Zero-pad batch + feature dims, cast activations to bf16 for the MXU.
    x_p = jnp.zeros((b_pad, s_pad), jnp.bfloat16).at[:B, :S].set(
        x.astype(jnp.bfloat16))

    kernel = functools.partial(actor_kernel, action_bound=float(action_bound))
    const = lambda i: (0, 0)  # weights/biases: same block every step (VMEM-resident)

    flops = 2 * b_pad * (s_pad * h1_p + h1_p * h2_p + h2_p * act_p)
    bytes_accessed = (
        x_p.size * x_p.dtype.itemsize
        + sum(a.size * a.dtype.itemsize for a in (w1, b1, w2, b2, w3, b3))
        + b_pad * act_p * 4)

    out_p = pl.pallas_call(
        kernel,
        out_shape=jax.ShapeDtypeStruct((b_pad, act_p), jnp.float32),
        grid=(b_pad // batch_tile,),
        in_specs=[
            pl.BlockSpec((batch_tile, s_pad), lambda i: (i, 0)),
            pl.BlockSpec(w1.shape, const),
            pl.BlockSpec(b1.shape, const),
            pl.BlockSpec(w2.shape, const),
            pl.BlockSpec(b2.shape, const),
            pl.BlockSpec(w3.shape, const),
            pl.BlockSpec(b3.shape, const),
        ],
        out_specs=pl.BlockSpec((batch_tile, act_p), lambda i: (i, 0)),
        compiler_params=pltpu.CompilerParams(
            dimension_semantics=("parallel",)),
        cost_estimate=pl.CostEstimate(
            flops=flops,
            transcendentals=b_pad * act_p,
            bytes_accessed=bytes_accessed),
    )(x_p, w1, b1, w2, b2, w3, b3)

    return out_p[:B, :action_dim]


def init_params(key, state_dim, action_dim):
    """Deterministic init mirroring the PyTorch module's init scheme
    (fanin_init uses weight.size()[0] == out_features — kept as-is).
    Returned in kernel layout: (in, out), zero-padded to lane multiples,
    bf16 weights / f32 biases."""
    k1, k2, k3, k4, k5, k6 = jax.random.split(key, 6)

    v1 = 1.0 / jnp.sqrt(jnp.float32(HID1))
    v2 = 1.0 / jnp.sqrt(jnp.float32(HID2))

    s_pad = _round_up(state_dim, 16)        # bf16 sublane-friendly K for fc1
    h1_p = _round_up(HID1, LANE)            # 512
    h2_p = _round_up(HID2, LANE)            # 384
    a_p = _round_up(action_dim, LANE)       # 128 (lane-dense output)

    def pad(a, shape):
        return jnp.zeros(shape, a.dtype).at[:a.shape[0], :a.shape[1]].set(a)

    w1 = jax.random.uniform(k1, (state_dim, HID1), jnp.float32, -v1, v1)
    b1 = jax.random.uniform(k2, (1, HID1), jnp.float32, -v1, v1)
    w2 = jax.random.uniform(k3, (HID1, HID2), jnp.float32, -v2, v2)
    b2 = jax.random.uniform(k4, (1, HID2), jnp.float32, -v2, v2)
    w3 = jax.random.uniform(k5, (HID2, action_dim), jnp.float32, -0.003, 0.003)
    b3 = jax.random.uniform(k6, (1, action_dim), jnp.float32, -0.003, 0.003)

    return (pad(w1.astype(jnp.bfloat16), (s_pad, h1_p)),
            pad(b1, (1, h1_p)),
            pad(w2.astype(jnp.bfloat16), (h1_p, h2_p)),
            pad(b2, (1, h2_p)),
            pad(w3.astype(jnp.bfloat16), (h2_p, a_p)),
            pad(b3, (1, a_p)))


def reference_forward(x, params, action_bound, action_dim):
    """f32 reference on the same bf16-cast values (padded cols are zero)."""
    w1, b1, w2, b2, w3, b3 = params
    B, S = x.shape
    xb = jnp.zeros((B, w1.shape[0]), jnp.float32).at[:, :S].set(
        x.astype(jnp.bfloat16).astype(jnp.float32))
    h = jnp.maximum(xb @ w1.astype(jnp.float32) + b1, 0.0)
    h = jnp.maximum(h.astype(jnp.bfloat16).astype(jnp.float32)
                    @ w2.astype(jnp.float32) + b2, 0.0)
    h = (h.astype(jnp.bfloat16).astype(jnp.float32)
         @ w3.astype(jnp.float32) + b3)
    return (jnp.tanh(h) * action_bound)[:, :action_dim]


if __name__ == "__main__":
    key = jax.random.PRNGKey(0)
    k_params, k_x = jax.random.split(key)

    batch = 2
    state_dim = 16
    action_dim = 4
    action_bound = 2.0

    params = init_params(k_params, state_dim, action_dim)
    x = jax.random.normal(k_x, (batch, state_dim), jnp.float32)

    out = actor_forward(x, params, action_bound, action_dim)
    out = jax.block_until_ready(out)

    ref = reference_forward(x, params, action_bound, action_dim)
    assert out.shape == (batch, action_dim)
    assert jnp.allclose(out, ref, atol=2e-3, rtol=2e-3), (
        float(jnp.max(jnp.abs(out - ref))))

    print("KERNEL_OK")
</pallas_src>

<mosaic_0001>
module attributes {stable_mosaic.version = 11 : i64} {
  func.func @actor_kernel(%arg0: i32, %arg1: memref<16x16xbf16, #tpu.memory_space<vmem>>, %arg2: memref<16x512xbf16, #tpu.memory_space<vmem>>, %arg3: memref<1x512xf32, #tpu.memory_space<vmem>>, %arg4: memref<512x384xbf16, #tpu.memory_space<vmem>>, %arg5: memref<1x384xf32, #tpu.memory_space<vmem>>, %arg6: memref<384x128xbf16, #tpu.memory_space<vmem>>, %arg7: memref<1x128xf32, #tpu.memory_space<vmem>>, %arg8: memref<16x128xf32, #tpu.memory_space<vmem>>) attributes {dimension_semantics = [#tpu.dimension_semantics<parallel>], iteration_bounds = array<i64: 1>, scalar_prefetch = 0 : i64, scratch_operands = 0 : i64, tpu.core_type = #tpu.core_type<tc>, window_params = [{transform_indices = @transform_0, window_bounds = array<i64: 16, 16>}, {pipeline_mode = #tpu.pipeline_mode<synchronous>, transform_indices = @transform_1, window_bounds = array<i64: 16, 512>}, {pipeline_mode = #tpu.pipeline_mode<synchronous>, transform_indices = @transform_2, window_bounds = array<i64: 1, 512>}, {pipeline_mode = #tpu.pipeline_mode<synchronous>, transform_indices = @transform_3, window_bounds = array<i64: 512, 384>}, {pipeline_mode = #tpu.pipeline_mode<synchronous>, transform_indices = @transform_4, window_bounds = array<i64: 1, 384>}, {pipeline_mode = #tpu.pipeline_mode<synchronous>, transform_indices = @transform_5, window_bounds = array<i64: 384, 128>}, {pipeline_mode = #tpu.pipeline_mode<synchronous>, transform_indices = @transform_6, window_bounds = array<i64: 1, 128>}, {transform_indices = @transform_7, window_bounds = array<i64: 16, 128>}]} {
    %c0 = arith.constant 0 : index
    %c0_0 = arith.constant 0 : index
    %0 = vector.load %arg1[%c0, %c0_0] : memref<16x16xbf16, #tpu.memory_space<vmem>>, vector<16x16xbf16>
    %c0_1 = arith.constant 0 : index
    %c0_2 = arith.constant 0 : index
    %1 = vector.load %arg2[%c0_1, %c0_2] : memref<16x512xbf16, #tpu.memory_space<vmem>>, vector<16x512xbf16>
    %cst = arith.constant dense<0.000000e+00> : vector<16x512xf32>
    %2 = tpu.matmul %0, %1, %cst {dimension_numbers = #tpu.dot_dimension_numbers<[1], [0], [0], [1], [0, 0, 1, 1], [], []>} : vector<16x16xbf16>, vector<16x512xbf16>, vector<16x512xf32> -> vector<16x512xf32>
    %c0_3 = arith.constant 0 : index
    %c0_4 = arith.constant 0 : index
    %3 = vector.load %arg3[%c0_3, %c0_4] : memref<1x512xf32, #tpu.memory_space<vmem>>, vector<1x512xf32>
    %4 = vector.broadcast %3 : vector<1x512xf32> to vector<16x512xf32>
    %5 = arith.addf %2, %4 : vector<16x512xf32>
    %cst_5 = arith.constant 0.000000e+00 : f32
    %6 = vector.broadcast %cst_5 : f32 to vector<16x512xf32>
    %7 = arith.maximumf %5, %6 : vector<16x512xf32>
    %8 = arith.truncf %7 : vector<16x512xf32> to vector<16x512xbf16>
    %c0_6 = arith.constant 0 : index
    %c0_7 = arith.constant 0 : index
    %9 = vector.load %arg4[%c0_6, %c0_7] : memref<512x384xbf16, #tpu.memory_space<vmem>>, vector<512x384xbf16>
    %cst_8 = arith.constant dense<0.000000e+00> : vector<16x384xf32>
    %10 = tpu.matmul %8, %9, %cst_8 {dimension_numbers = #tpu.dot_dimension_numbers<[1], [0], [0], [1], [0, 0, 1, 1], [], []>} : vector<16x512xbf16>, vector<512x384xbf16>, vector<16x384xf32> -> vector<16x384xf32>
    %c0_9 = arith.constant 0 : index
    %c0_10 = arith.constant 0 : index
    %11 = vector.load %arg5[%c0_9, %c0_10] : memref<1x384xf32, #tpu.memory_space<vmem>>, vector<1x384xf32>
    %12 = vector.broadcast %11 : vector<1x384xf32> to vector<16x384xf32>
    %13 = arith.addf %10, %12 : vector<16x384xf32>
    %cst_11 = arith.constant 0.000000e+00 : f32
    %14 = vector.broadcast %cst_11 : f32 to vector<16x384xf32>
    %15 = arith.maximumf %13, %14 : vector<16x384xf32>
    %16 = arith.truncf %15 : vector<16x384xf32> to vector<16x384xbf16>
    %c0_12 = arith.constant 0 : index
    %c0_13 = arith.constant 0 : index
    %17 = vector.load %arg6[%c0_12, %c0_13] : memref<384x128xbf16, #tpu.memory_space<vmem>>, vector<384x128xbf16>
    %cst_14 = arith.constant dense<0.000000e+00> : vector<16x128xf32>
    %18 = tpu.matmul %16, %17, %cst_14 {dimension_numbers = #tpu.dot_dimension_numbers<[1], [0], [0], [1], [0, 0, 1, 1], [], []>} : vector<16x384xbf16>, vector<384x128xbf16>, vector<16x128xf32> -> vector<16x128xf32>
    %c0_15 = arith.constant 0 : index
    %c0_16 = arith.constant 0 : index
    %19 = vector.load %arg7[%c0_15, %c0_16] : memref<1x128xf32, #tpu.memory_space<vmem>>, vector<1x128xf32>
    %20 = vector.broadcast %19 : vector<1x128xf32> to vector<16x128xf32>
    %21 = arith.addf %18, %20 : vector<16x128xf32>
    %22 = math.tanh %21 : vector<16x128xf32>
    %cst_17 = arith.constant 2.000000e+00 : f32
    %23 = vector.broadcast %cst_17 : f32 to vector<16x128xf32>
    %24 = arith.mulf %22, %23 : vector<16x128xf32>
    %c0_18 = arith.constant 0 : index
    %c0_19 = arith.constant 0 : index
    %25 = vector.load %arg8[%c0_18, %c0_19] : memref<16x128xf32, #tpu.memory_space<vmem>>, vector<16x128xf32>
    tpu.vector_store %arg8[%c0_18, %c0_19], %24 {strides = array<i32>} : memref<16x128xf32, #tpu.memory_space<vmem>>, vector<16x128xf32>,
    return
  }
  func.func @transform_0(%arg0: i32) -> (i32, i32) {
    %c0_i32 = arith.constant 0 : i32
    %c0_i32_0 = arith.constant 0 : i32
    return %arg0, %c0_i32 : i32, i32
  }
  func.func @transform_1(%arg0: i32) -> (i32, i32) {
    %c0_i32 = arith.constant 0 : i32
    %c0_i32_0 = arith.constant 0 : i32
    %c0_i32_1 = arith.constant 0 : i32
    return %c0_i32, %c0_i32_0 : i32, i32
  }
  func.func @transform_2(%arg0: i32) -> (i32, i32) {
    %c0_i32 = arith.constant 0 : i32
    %c0_i32_0 = arith.constant 0 : i32
    %c0_i32_1 = arith.constant 0 : i32
    return %c0_i32, %c0_i32_0 : i32, i32
  }
  func.func @transform_3(%arg0: i32) -> (i32, i32) {
    %c0_i32 = arith.constant 0 : i32
    %c0_i32_0 = arith.constant 0 : i32
    %c0_i32_1 = arith.constant 0 : i32
    return %c0_i32, %c0_i32_0 : i32, i32
  }
  func.func @transform_4(%arg0: i32) -> (i32, i32) {
    %c0_i32 = arith.constant 0 : i32
    %c0_i32_0 = arith.constant 0 : i32
    %c0_i32_1 = arith.constant 0 : i32
    return %c0_i32, %c0_i32_0 : i32, i32
  }
  func.func @transform_5(%arg0: i32) -> (i32, i32) {
    %c0_i32 = arith.constant 0 : i32
    %c0_i32_0 = arith.constant 0 : i32
    %c0_i32_1 = arith.constant 0 : i32
    return %c0_i32, %c0_i32_0 : i32, i32
  }
  func.func @transform_6(%arg0: i32) -> (i32, i32) {
    %c0_i32 = arith.constant 0 : i32
    %c0_i32_0 = arith.constant 0 : i32
    %c0_i32_1 = arith.constant 0 : i32
    return %c0_i32, %c0_i32_0 : i32, i32
  }
  func.func @transform_7(%arg0: i32) -> (i32, i32) {
    %c0_i32 = arith.constant 0 : i32
    %c0_i32_0 = arith.constant 0 : i32
    return %arg0, %c0_i32 : i32, i32
  }
}

</mosaic_0001>

<llo_original>
// kernel: tpu_custom_call.1
$region0: #{tpu_custom_call.1}
  #allocation0 [shape = 'u32[]', space=smem, size = 0x4, offset = 0x4, fixed_abs, tag = 'smem constant byte address 0x4 - core index']
  #allocation1 [shape = 'u32[144,128]{1,0:T(1,128)}', space=vmem, size = 0x12000, scoped, tag = 'internal scratch']
  %s0 = inlined_call_operand.hbm [shape: bf16[16,16], index: 0, kind: input, shape index: {}]
  %s1 = inlined_call_operand.hbm [shape: bf16[16,512], index: 1, kind: input, shape index: {}]
  %s2 = inlined_call_operand.vmem [shape: f32[1,512], index: 2, kind: input, shape index: {}]
  %s3 = inlined_call_operand.hbm [shape: bf16[512,384], index: 3, kind: input, shape index: {}]
  %s4 = inlined_call_operand.vmem [shape: f32[1,384], index: 4, kind: input, shape index: {}]
  %s5 = inlined_call_operand.hbm [shape: bf16[384,128], index: 5, kind: input, shape index: {}]
  %s6 = inlined_call_operand.vmem [shape: f32[1,128], index: 6, kind: input, shape index: {}]
  %s7 = inlined_call_operand.hbm [shape: f32[16,128], index: 7, kind: output, shape index: {}]
  %s8 = sld [smem:[#allocation0]]
  $region54: #{tpu_custom_call.1} parent=0
    _
  %s10 = ssub.s32 1, %s8
  %s11 = scalar_select 0, %s10, %s8
  $region1: #{tpu_custom_call.1} parent=0
    #allocation2 [shape = 'u8[4096]{0}', space=vmem, size = 0x1000, scoped, tag = 'input window, operand 0, single buffered']
    #allocation3 [shape = 's32[1]{0}', space=sflag, size = 0x4, scoped, tag = 'scoped memory for tpu_custom_call.1']
    #allocation4 [shape = 's32[1]{0}', space=sflag, size = 0x4, scoped, tag = 'scoped memory for tpu_custom_call.1']
    #allocation5 [shape = 'u8[16384]{0}', space=vmem, size = 0x4000, scoped, tag = 'input window, operand 1, single buffered']
    #allocation6 [shape = 's32[1]{0}', space=sflag, size = 0x4, scoped, tag = 'scoped memory for tpu_custom_call.1']
    #allocation7 [shape = 'u8[393216]{0}', space=vmem, size = 0x60000, scoped, tag = 'input window, operand 3, single buffered']
    #allocation8 [shape = 'u8[98304]{0}', space=vmem, size = 0x18000, scoped, tag = 'input window, operand 5, single buffered']
    #allocation9 [shape = 's32[1]{0}', space=sflag, size = 0x4, scoped, tag = 'scoped memory for tpu_custom_call.1']
    #allocation10 [shape = 'u8[8192]{0}', space=vmem, size = 0x2000, scoped, tag = 'output window, operand 0, single buffered']
    %12 = vsyncpa [#allocation3], 0
    %13 = vsyncpa [#allocation6], 0
    %14 = vsyncpa [#allocation9], 0
    %15 = vsyncpa [#allocation4], 0
    // Predicated region
    $region2: #{tpu_custom_call.1} parent=1 // pred_check
      _
    $region3: #{tpu_custom_call.1} parent=1 // pred_check_branch
      %17 = sbr.rel (0) target = $region5
    $region4: #{tpu_custom_call.1} parent=1 // pred_region
      %s19 = ssub.s32 128, 128
      %20 = vsyncadd [#allocation3], %s19
      %s21 = sshll.u32 [#allocation2], 4
      %s22 = int_to_ptr.vmem [resolvable:$true] %s21
      %27 = dma.hbm_to_vmem [thread:$0]  %s0, 128, %s22, [#allocation3], 64, 64, 4
    $region5: #{tpu_custom_call.1} parent=1 // pred_fallthru
      _
    // Predicated region
    $region6: #{tpu_custom_call.1} parent=1 // pred_check
      _
    $region7: #{tpu_custom_call.1} parent=1 // pred_check_branch
      %29 = sbr.rel (0) target = $region9
    $region8: #{tpu_custom_call.1} parent=1 // pred_region
      %s31 = ssub.s32 512, 512
      %32 = vsyncadd [#allocation6], %s31
      %s33 = sshll.u32 [#allocation5], 4
      %s34 = int_to_ptr.vmem [resolvable:$true] %s33
      %39 = dma.hbm_to_vmem [thread:$0]  %s1, 512, %s34, [#allocation6], 256, 256, 16
    $region9: #{tpu_custom_call.1} parent=1 // pred_fallthru
      _
    // Predicated region
    $region10: #{tpu_custom_call.1} parent=1 // pred_check
      _
    $region11: #{tpu_custom_call.1} parent=1 // pred_check_branch
      %41 = sbr.rel (0) target = $region13
    $region12: #{tpu_custom_call.1} parent=1 // pred_region
      _
    $region13: #{tpu_custom_call.1} parent=1 // pred_fallthru
      _
    // Predicated region
    $region14: #{tpu_custom_call.1} parent=1 // pred_check
      _
    $region15: #{tpu_custom_call.1} parent=1 // pred_check_branch
      %43 = sbr.rel (0) target = $region17
    $region16: #{tpu_custom_call.1} parent=1 // pred_region
      %s45 = ssub.s32 12288, 12288
      %46 = vsyncadd [#allocation6], %s45
      %s47 = sshll.u32 [#allocation7], 4
      %s48 = int_to_ptr.vmem [resolvable:$true] %s47
      %53 = dma.hbm_to_vmem [thread:$0]  %s3, 12288, %s48, [#allocation6], 192, 192, 12
    $region17: #{tpu_custom_call.1} parent=1 // pred_fallthru
      _
    // Predicated region
    $region18: #{tpu_custom_call.1} parent=1 // pred_check
      _
    $region19: #{tpu_custom_call.1} parent=1 // pred_check_branch
      %55 = sbr.rel (0) target = $region21
    $region20: #{tpu_custom_call.1} parent=1 // pred_region
      _
    $region21: #{tpu_custom_call.1} parent=1 // pred_fallthru
      _
    // Predicated region
    $region22: #{tpu_custom_call.1} parent=1 // pred_check
      _
    $region23: #{tpu_custom_call.1} parent=1 // pred_check_branch
      %57 = sbr.rel (0) target = $region25
    $region24: #{tpu_custom_call.1} parent=1 // pred_region
      %s59 = ssub.s32 3072, 3072
      %60 = vsyncadd [#allocation9], %s59
      %s61 = sshll.u32 [#allocation8], 4
      %s62 = int_to_ptr.vmem [resolvable:$true] %s61
      %67 = dma.hbm_to_vmem [thread:$0]  %s5, 3072, %s62, [#allocation9], 64, 64, 4
    $region25: #{tpu_custom_call.1} parent=1 // pred_fallthru
      _
    // Predicated region
    $region26: #{tpu_custom_call.1} parent=1 // pred_check
      _
    $region27: #{tpu_custom_call.1} parent=1 // pred_check_branch
      %69 = sbr.rel (0) target = $region29
    $region28: #{tpu_custom_call.1} parent=1 // pred_region
      _
    $region29: #{tpu_custom_call.1} parent=1 // pred_fallthru
      _
    // Predicated region
    $region30: #{tpu_custom_call.1} parent=1 // pred_check
      _
    $region31: #{tpu_custom_call.1} parent=1 // pred_check_branch
      %71 = sbr.rel (0) target = $region33
    $region32: #{tpu_custom_call.1} parent=1 // pred_region
      %72 = dma.done [#allocation3], 128
    $region33: #{tpu_custom_call.1} parent=1 // pred_fallthru
      _
    // Predicated region
    $region34: #{tpu_custom_call.1} parent=1 // pred_check
      _
    $region35: #{tpu_custom_call.1} parent=1 // pred_check_branch
      %74 = sbr.rel (0) target = $region37
    $region36: #{tpu_custom_call.1} parent=1 // pred_region
      %75 = dma.done [#allocation6], 512
    $region37: #{tpu_custom_call.1} parent=1 // pred_fallthru
      _
    // Predicated region
    $region38: #{tpu_custom_call.1} parent=1 // pred_check
      _
    $region39: #{tpu_custom_call.1} parent=1 // pred_check_branch
      %77 = sbr.rel (0) target = $region41
    $region40: #{tpu_custom_call.1} parent=1 // pred_region
      %78 = dma.done [#allocation6], 12288
    $region41: #{tpu_custom_call.1} parent=1 // pred_fallthru
      _
    // Predicated region
    $region42: #{tpu_custom_call.1} parent=1 // pred_check
      _
    $region43: #{tpu_custom_call.1} parent=1 // pred_check_branch
      %80 = sbr.rel (0) target = $region45
    $region44: #{tpu_custom_call.1} parent=1 // pred_region
      %81 = dma.done [#allocation9], 3072
    $region45: #{tpu_custom_call.1} parent=1 // pred_fallthru
      _
    %v83 = vld [vmem:[#allocation2] sm:$0xf]
    %v84 = vld [vmem:[#allocation2 + $0x4] sm:$0xf]
    %v85 = vld [vmem:[#allocation5] sm:$0xff]
    %v86 = vld [vmem:[#allocation5 + $0x8] sm:$0xff]
    %v87 = vld [vmem:[#allocation5 + $0x10] sm:$0xff]
    %v88 = vld [vmem:[#allocation5 + $0x18] sm:$0xff]
    %v89 = vld [vmem:[%s2] sm:$0xf]
    %v91 = vlaneseq
    %v92 = vshrl.u32 %v91, 7
    %v93 = vsub.s32 0, %v92
    %v94 = vrot.slane %v89, %v93
    %v95 = vlaneseq
    %v96 = vshrl.u32 %v95, 7
    %v97 = vsub.s32 1, %v96
    %v98 = vrot.slane %v89, %v97
    %v99 = vlaneseq
    %v100 = vshrl.u32 %v99, 7
    %v101 = vsub.s32 2, %v100
    %v102 = vrot.slane %v89, %v101
    %v103 = vlaneseq
    %v104 = vshrl.u32 %v103, 7
    %v105 = vsub.s32 3, %v104
    %v106 = vrot.slane %v89, %v105
    %v113 = vunpack.c.l.b16 %v83
    %v114 = vunpack.c.l.b16 %v84
    %v115 = vpack.c.b16 %v114, %v113
    %v120 = vunpack.c.l.b16 %v85
    %v121 = vunpack.c.h.b16 %v85
    %v122 = vunpack.c.l.b16 %v86
    %v123 = vunpack.c.h.b16 %v86
    %v124 = vunpack.c.l.b16 %v87
    %v125 = vunpack.c.h.b16 %v87
    %v126 = vunpack.c.l.b16 %v88
    %v127 = vunpack.c.h.b16 %v88
    %v128 = vpack.c.b16 %v124, %v120
    %v129 = vpack.c.b16 %v125, %v121
    %v130 = vpack.c.b16 %v126, %v122
    %v131 = vpack.c.b16 %v127, %v123
    %vm136 = vcmask 130048
    %v138 = vsel %vm136, %v115, 0
    %140 = vmatprep.subr.bf16.mxu0 %v129
    %141 = vmatpush1.bf16.msra.mxu0 %v128
    %142 = vmatprep.subr.bf16.mxu0 0
    %143 = vmatpush1.bf16.msra.mxu0 0
    %144 = vmatprep.subr.bf16.mxu0 0
    %145 = vmatpush1.bf16.msra.mxu0 0
    %146 = vmatprep.subr.bf16.mxu0 0
    %147 = vmatpush1.bf16.msra.mxu0 0
    %148 = vmatprep.subr.bf16.mxu0 0
    %149 = vmatpush1.bf16.msra.mxu0 0
    %150 = vmatprep.subr.bf16.mxu0 0
    %151 = vmatpush1.bf16.msra.mxu0 0
    %152 = vmatprep.subr.bf16.mxu0 0
    %153 = vmatpush1.bf16.msra.mxu0 0
    %154 = vmatprep.subr.bf16.mxu0 0
    %155 = vmatpush1.bf16.msra.mxu0 0
    %156 = vmatprep.subr.bf16.mxu0 0
    %157 = vmatpush1.bf16.msra.mxu0 0
    %158 = vmatprep.subr.bf16.mxu0 0
    %159 = vmatpush1.bf16.msra.mxu0 0
    %160 = vmatprep.subr.bf16.mxu0 0
    %161 = vmatpush1.bf16.msra.mxu0 0
    %162 = vmatprep.subr.bf16.mxu0 0
    %163 = vmatpush1.bf16.msra.mxu0 0
    %164 = vmatprep.subr.bf16.mxu0 0
    %165 = vmatpush1.bf16.msra.mxu0 0
    %166 = vmatprep.subr.bf16.mxu0 0
    %167 = vmatpush1.bf16.msra.mxu0 0
    %168 = vmatprep.subr.bf16.mxu0 0
    %169 = vmatpush1.bf16.msra.mxu0 0
    %170 = vmatprep.subr.bf16.mxu0 0
    %171 = vmatpush1.bf16.msra.mxu0 0
    %172 = vmatprep.mubr.bf16.mxu0 0
    %173 = vmatmul.mubr.bf16.gmra.mrb[0].mxu0 %v138
    %v174 = vpop.f32.mrb[0].mxu0
    %v175 = vadd.f32 %v94, %v174
    %v176 = vpop.f32.mrb[0].mxu0
    %v177 = vadd.f32 %v98, %v176
    %v178 = vpop.f32.mrb[0].mxu0
    %v179 = vadd.f32 %v94, %v178
    %v180 = vpop.f32.mrb[0].mxu0
    %v181 = vadd.f32 %v98, %v180
    %182 = vdwg.mxu0
    %183 = vmatprep.subr.bf16.mxu0 %v131
    %184 = vmatpush1.bf16.msra.mxu0 %v130
    %185 = vmatprep.subr.bf16.mxu0 0
    %186 = vmatpush1.bf16.msra.mxu0 0
    %187 = vmatprep.subr.bf16.mxu0 0
    %188 = vmatpush1.bf16.msra.mxu0 0
    %189 = vmatprep.subr.bf16.mxu0 0
    %190 = vmatpush1.bf16.msra.mxu0 0
    %191 = vmatprep.subr.bf16.mxu0 0
    %192 = vmatpush1.bf16.msra.mxu0 0
    %193 = vmatprep.subr.bf16.mxu0 0
    %194 = vmatpush1.bf16.msra.mxu0 0
    %195 = vmatprep.subr.bf16.mxu0 0
    %196 = vmatpush1.bf16.msra.mxu0 0
    %197 = vmatprep.subr.bf16.mxu0 0
    %198 = vmatpush1.bf16.msra.mxu0 0
    %199 = vmatprep.subr.bf16.mxu0 0
    %200 = vmatpush1.bf16.msra.mxu0 0
    %201 = vmatprep.subr.bf16.mxu0 0
    %202 = vmatpush1.bf16.msra.mxu0 0
    %203 = vmatprep.subr.bf16.mxu0 0
    %204 = vmatpush1.bf16.msra.mxu0 0
    %205 = vmatprep.subr.bf16.mxu0 0
    %206 = vmatpush1.bf16.msra.mxu0 0
    %207 = vmatprep.subr.bf16.mxu0 0
    %208 = vmatpush1.bf16.msra.mxu0 0
    %209 = vmatprep.subr.bf16.mxu0 0
    %210 = vmatpush1.bf16.msra.mxu0 0
    %211 = vmatprep.subr.bf16.mxu0 0
    %212 = vmatpush1.bf16.msra.mxu0 0
    %213 = vmatprep.subr.bf16.mxu0 0
    %214 = vmatpush1.bf16.msra.mxu0 0
    %215 = vmatprep.mubr.bf16.mxu0 0
    %216 = vmatmul.mubr.bf16.gmra.mrb[0].mxu0 %v138
    %v217 = vpop.f32.mrb[0].mxu0
    %v218 = vadd.f32 %v102, %v217
    %v219 = vpop.f32.mrb[0].mxu0
    %v220 = vadd.f32 %v106, %v219
    %v221 = vpop.f32.mrb[0].mxu0
    %v222 = vadd.f32 %v102, %v221
    %v223 = vpop.f32.mrb[0].mxu0
    %v224 = vadd.f32 %v106, %v223
    %225 = vdwg.mxu0
    %v226 = vmax.f32 %v175, 0.0
    %v227 = vmax.f32 %v177, 0.0
    %v228 = vmax.f32 %v218, 0.0
    %v229 = vmax.f32 %v220, 0.0
    %v230 = vmax.f32 %v179, 0.0
    %v231 = vmax.f32 %v181, 0.0
    %v232 = vmax.f32 %v222, 0.0
    %v233 = vmax.f32 %v224, 0.0
    %v234 = vpack.c.bf16 %v230, %v226
    %v235 = vpack.c.bf16 %v231, %v227
    %v236 = vpack.c.bf16 %v232, %v228
    %v237 = vpack.c.bf16 %v233, %v229
    %v238 = vld [vmem:[#allocation7] sm:$0xff]
    %v239 = vld [vmem:[#allocation7 + $0x8] sm:$0xf]
    %v240 = vld [vmem:[#allocation7 + $0xc] sm:$0xff]
    %v241 = vld [vmem:[#allocation7 + $0x14] sm:$0xf]
    %v242 = vld [vmem:[#allocation7 + $0x18] sm:$0xff]
    %v243 = vld [vmem:[#allocation7 + $0x20] sm:$0xf]
    %v244 = vld [vmem:[#allocation7 + $0x24] sm:$0xff]
    %v245 = vld [vmem:[#allocation7 + $0x2c] sm:$0xf]
    %v246 = vld [vmem:[#allocation7 + $0x30] sm:$0xff]
    %v247 = vld [vmem:[#allocation7 + $0x38] sm:$0xf]
    %v248 = vld [vmem:[#allocation7 + $0x3c] sm:$0xff]
    %v249 = vld [vmem:[#allocation7 + $0x44] sm:$0xf]
    %v250 = vld [vmem:[#allocation7 + $0x48] sm:$0xff]
    %v251 = vld [vmem:[#allocation7 + $0x50] sm:$0xf]
    %v252 = vld [vmem:[#allocation7 + $0x54] sm:$0xff]
    %v253 = vld [vmem:[#allocation7 + $0x5c] sm:$0xf]
    %v254 = vld [vmem:[#allocation7 + $0x60] sm:$0xff]
    %v255 = vld [vmem:[#allocation7 + $0x68] sm:$0xf]
    %v256 = vld [vmem:[#allocation7 + $0x6c] sm:$0xff]
    %v257 = vld [vmem:[#allocation7 + $0x74] sm:$0xf]
    %v258 = vld [vmem:[#allocation7 + $0x78] sm:$0xff]
    %v259 = vld [vmem:[#allocation7 + $0x80] sm:$0xf]
    %v260 = vld [vmem:[#allocation7 + $0x84] sm:$0xff]
    %v261 = vld [vmem:[#allocation7 + $0x8c] sm:$0xf]
    %v262 = vld [vmem:[#allocation7 + $0x90] sm:$0xff]
    %v263 = vld [vmem:[#allocation7 + $0x98] sm:$0xf]
    %v264 = vld [vmem:[#allocation7 + $0x9c] sm:$0xff]
    %v265 = vld [vmem:[#allocation7 + $0xa4] sm:$0xf]
    %v266 = vld [vmem:[#allocation7 + $0xa8] sm:$0xff]
    %v267 = vld [vmem:[#allocation7 + $0xb0] sm:$0xf]
    %v268 = vld [vmem:[#allocation7 + $0xb4] sm:$0xff]
    %v269 = vld [vmem:[#allocation7 + $0xbc] sm:$0xf]
    %v270 = vld [vmem:[#allocation7 + $0xc0] sm:$0xff]
    %v271 = vld [vmem:[#allocation7 + $0xc8] sm:$0xf]
    %v272 = vld [vmem:[#allocation7 + $0xcc] sm:$0xff]
    %v273 = vld [vmem:[#allocation7 + $0xd4] sm:$0xf]
    %v274 = vld [vmem:[#allocation7 + $0xd8] sm:$0xff]
    %v275 = vld [vmem:[#allocation7 + $0xe0] sm:$0xf]
    %v276 = vld [vmem:[#allocation7 + $0xe4] sm:$0xff]
    %v277 = vld [vmem:[#allocation7 + $0xec] sm:$0xf]
    %v278 = vld [vmem:[#allocation7 + $0xf0] sm:$0xff]
    %v279 = vld [vmem:[#allocation7 + $0xf8] sm:$0xf]
    %v280 = vld [vmem:[#allocation7 + $0xfc] sm:$0xff]
    %v281 = vld [vmem:[#allocation7 + $0x104] sm:$0xf]
    %v282 = vld [vmem:[#allocation7 + $0x108] sm:$0xff]
    %v283 = vld [vmem:[#allocation7 + $0x110] sm:$0xf]
    %v284 = vld [vmem:[#allocation7 + $0x114] sm:$0xff]
    %v285 = vld [vmem:[#allocation7 + $0x11c] sm:$0xf]
    %v286 = vld [vmem:[#allocation7 + $0x120] sm:$0xff]
    %v287 = vld [vmem:[#allocation7 + $0x128] sm:$0xf]
    %v288 = vld [vmem:[#allocation7 + $0x12c] sm:$0xff]
    %v289 = vld [vmem:[#allocation7 + $0x134] sm:$0xf]
    %v290 = vld [vmem:[#allocation7 + $0x138] sm:$0xff]
    %v291 = vld [vmem:[#allocation7 + $0x140] sm:$0xf]
    %v292 = vld [vmem:[#allocation7 + $0x144] sm:$0xff]
    %v293 = vld [vmem:[#allocation7 + $0x14c] sm:$0xf]
    %v294 = vld [vmem:[#allocation7 + $0x150] sm:$0xff]
    %v295 = vld [vmem:[#allocation7 + $0x158] sm:$0xf]
    %v296 = vld [vmem:[#allocation7 + $0x15c] sm:$0xff]
    %v297 = vld [vmem:[#allocation7 + $0x164] sm:$0xf]
    %v298 = vld [vmem:[#allocation7 + $0x168] sm:$0xff]
    %v299 = vld [vmem:[#allocation7 + $0x170] sm:$0xf]
    %v300 = vld [vmem:[#allocation7 + $0x174] sm:$0xff]
    %v301 = vld [vmem:[#allocation7 + $0x17c] sm:$0xf]
    %v302 = vld [vmem:[#allocation7 + $0x180] sm:$0xff]
    %v303 = vld [vmem:[#allocation7 + $0x188] sm:$0xf]
    %v304 = vld [vmem:[#allocation7 + $0x18c] sm:$0xff]
    %v305 = vld [vmem:[#allocation7 + $0x194] sm:$0xf]
    %v306 = vld [vmem:[#allocation7 + $0x198] sm:$0xff]
    %v307 = vld [vmem:[#allocation7 + $0x1a0] sm:$0xf]
    %v308 = vld [vmem:[#allocation7 + $0x1a4] sm:$0xff]
    %v309 = vld [vmem:[#allocation7 + $0x1ac] sm:$0xf]
    %v310 = vld [vmem:[#allocation7 + $0x1b0] sm:$0xff]
    %v311 = vld [vmem:[#allocation7 + $0x1b8] sm:$0xf]
    %v312 = vld [vmem:[#allocation7 + $0x1bc] sm:$0xff]
    %v313 = vld [vmem:[#allocation7 + $0x1c4] sm:$0xf]
    %v314 = vld [vmem:[#allocation7 + $0x1c8] sm:$0xff]
    %v315 = vld [vmem:[#allocation7 + $0x1d0] sm:$0xf]
    %v316 = vld [vmem:[#allocation7 + $0x1d4] sm:$0xff]
    %v317 = vld [vmem:[#allocation7 + $0x1dc] sm:$0xf]
    %v318 = vld [vmem:[#allocation7 + $0x1e0] sm:$0xff]
    %v319 = vld [vmem:[#allocation7 + $0x1e8] sm:$0xf]
    %v320 = vld [vmem:[#allocation7 + $0x1ec] sm:$0xff]
    %v321 = vld [vmem:[#allocation7 + $0x1f4] sm:$0xf]
    %v322 = vld [vmem:[#allocation7 + $0x1f8] sm:$0xff]
    %v323 = vld [vmem:[#allocation7 + $0x200] sm:$0xf]
    %v324 = vld [vmem:[#allocation7 + $0x204] sm:$0xff]
    %v325 = vld [vmem:[#allocation7 + $0x20c] sm:$0xf]
    %v326 = vld [vmem:[#allocation7 + $0x210] sm:$0xff]
    %v327 = vld [vmem:[#allocation7 + $0x218] sm:$0xf]
    %v328 = vld [vmem:[#allocation7 + $0x21c] sm:$0xff]
    %v329 = vld [vmem:[#allocation7 + $0x224] sm:$0xf]
    %v330 = vld [vmem:[#allocation7 + $0x228] sm:$0xff]
    %v331 = vld [vmem:[#allocation7 + $0x230] sm:$0xf]
    %v332 = vld [vmem:[#allocation7 + $0x234] sm:$0xff]
    %v333 = vld [vmem:[#allocation7 + $0x23c] sm:$0xf]
    %v334 = vld [vmem:[#allocation7 + $0x240] sm:$0xff]
    %v335 = vld [vmem:[#allocation7 + $0x248] sm:$0xf]
    %v336 = vld [vmem:[#allocation7 + $0x24c] sm:$0xff]
    %v337 = vld [vmem:[#allocation7 + $0x254] sm:$0xf]
    %v338 = vld [vmem:[#allocation7 + $0x258] sm:$0xff]
    %v339 = vld [vmem:[#allocation7 + $0x260] sm:$0xf]
    %v340 = vld [vmem:[#allocation7 + $0x264] sm:$0xff]
    %v341 = vld [vmem:[#allocation7 + $0x26c] sm:$0xf]
    %v342 = vld [vmem:[#allocation7 + $0x270] sm:$0xff]
    %v343 = vld [vmem:[#allocation7 + $0x278] sm:$0xf]
    %v344 = vld [vmem:[#allocation7 + $0x27c] sm:$0xff]
    %v345 = vld [vmem:[#allocation7 + $0x284] sm:$0xf]
    %v346 = vld [vmem:[#allocation7 + $0x288] sm:$0xff]
    %v347 = vld [vmem:[#allocation7 + $0x290] sm:$0xf]
    %v348 = vld [vmem:[#allocation7 + $0x294] sm:$0xff]
    %v349 = vld [vmem:[#allocation7 + $0x29c] sm:$0xf]
    %v350 = vld [vmem:[#allocation7 + $0x2a0] sm:$0xff]
    %v351 = vld [vmem:[#allocation7 + $0x2a8] sm:$0xf]
    %v352 = vld [vmem:[#allocation7 + $0x2ac] sm:$0xff]
    %v353 = vld [vmem:[#allocation7 + $0x2b4] sm:$0xf]
    %v354 = vld [vmem:[#allocation7 + $0x2b8] sm:$0xff]
    %v355 = vld [vmem:[#allocation7 + $0x2c0] sm:$0xf]
    %v356 = vld [vmem:[#allocation7 + $0x2c4] sm:$0xff]
    %v357 = vld [vmem:[#allocation7 + $0x2cc] sm:$0xf]
    %v358 = vld [vmem:[#allocation7 + $0x2d0] sm:$0xff]
    %v359 = vld [vmem:[#allocation7 + $0x2d8] sm:$0xf]
    %v360 = vld [vmem:[#allocation7 + $0x2dc] sm:$0xff]
    %v361 = vld [vmem:[#allocation7 + $0x2e4] sm:$0xf]
    %v362 = vld [vmem:[#allocation7 + $0x2e8] sm:$0xff]
    %v363 = vld [vmem:[#allocation7 + $0x2f0] sm:$0xf]
    %v364 = vld [vmem:[#allocation7 + $0x2f4] sm:$0xff]
    %v365 = vld [vmem:[#allocation7 + $0x2fc] sm:$0xf]
    %v366 = vld [vmem:[%s4] sm:$0x7]
    %v368 = vlaneseq
    %v369 = vshrl.u32 %v368, 7
    %v370 = vsub.s32 0, %v369
    %v371 = vrot.slane %v366, %v370
    %v372 = vlaneseq
    %v373 = vshrl.u32 %v372, 7
    %v374 = vsub.s32 1, %v373
    %v375 = vrot.slane %v366, %v374
    %v376 = vlaneseq
    %v377 = vshrl.u32 %v376, 7
    %v378 = vsub.s32 2, %v377
    %v379 = vrot.slane %v366, %v378
    %v511 = vunpack.c.l.b16 %v238
    %v512 = vunpack.c.h.b16 %v238
    %v513 = vunpack.c.l.b16 %v239
    %v514 = vunpack.c.l.b16 %v240
    %v515 = vunpack.c.h.b16 %v240
    %v516 = vunpack.c.l.b16 %v241
    %v517 = vunpack.c.l.b16 %v242
    %v518 = vunpack.c.h.b16 %v242
    %v519 = vunpack.c.l.b16 %v243
    %v520 = vunpack.c.l.b16 %v244
    %v521 = vunpack.c.h.b16 %v244
    %v522 = vunpack.c.l.b16 %v245
    %v523 = vunpack.c.l.b16 %v246
    %v524 = vunpack.c.h.b16 %v246
    %v525 = vunpack.c.l.b16 %v247
    %v526 = vunpack.c.l.b16 %v248
    %v527 = vunpack.c.h.b16 %v248
    %v528 = vunpack.c.l.b16 %v249
    %v529 = vunpack.c.l.b16 %v250
    %v530 = vunpack.c.h.b16 %v250
    %v531 = vunpack.c.l.b16 %v251
    %v532 = vunpack.c.l.b16 %v252
    %v533 = vunpack.c.h.b16 %v252
    %v534 = vunpack.c.l.b16 %v253
    %v535 = vunpack.c.l.b16 %v254
    %v536 = vunpack.c.h.b16 %v254
    %v537 = vunpack.c.l.b16 %v255
    %v538 = vunpack.c.l.b16 %v256
    %v539 = vunpack.c.h.b16 %v256
    %v540 = vunpack.c.l.b16 %v257
    %v541 = vunpack.c.l.b16 %v258
    %v542 = vunpack.c.h.b16 %v258
    %v543 = vunpack.c.l.b16 %v259
    %v544 = vunpack.c.l.b16 %v260
    %v545 = vunpack.c.h.b16 %v260
    %v546 = vunpack.c.l.b16 %v261
    %v547 = vunpack.c.l.b16 %v262
    %v548 = vunpack.c.h.b16 %v262
    %v549 = vunpack.c.l.b16 %v263
    %v550 = vunpack.c.l.b16 %v264
    %v551 = vunpack.c.h.b16 %v264
    %v552 = vunpack.c.l.b16 %v265
    %v553 = vunpack.c.l.b16 %v266
    %v554 = vunpack.c.h.b16 %v266
    %v555 = vunpack.c.l.b16 %v267
    %v556 = vunpack.c.l.b16 %v268
    %v557 = vunpack.c.h.b16 %v268
    %v558 = vunpack.c.l.b16 %v269
    %v559 = vunpack.c.l.b16 %v270
    %v560 = vunpack.c.h.b16 %v270
    %v561 = vunpack.c.l.b16 %v271
    %v562 = vunpack.c.l.b16 %v272
    %v563 = vunpack.c.h.b16 %v272
    %v564 = vunpack.c.l.b16 %v273
    %v565 = vunpack.c.l.b16 %v274
    %v566 = vunpack.c.h.b16 %v274
    %v567 = vunpack.c.l.b16 %v275
    %v568 = vunpack.c.l.b16 %v276
    %v569 = vunpack.c.h.b16 %v276
    %v570 = vunpack.c.l.b16 %v277
    %v571 = vunpack.c.l.b16 %v278
    %v572 = vunpack.c.h.b16 %v278
    %v573 = vunpack.c.l.b16 %v279
    %v574 = vunpack.c.l.b16 %v280
    %v575 = vunpack.c.h.b16 %v280
    %v576 = vunpack.c.l.b16 %v281
    %v577 = vunpack.c.l.b16 %v282
    %v578 = vunpack.c.h.b16 %v282
    %v579 = vunpack.c.l.b16 %v283
    %v580 = vunpack.c.l.b16 %v284
    %v581 = vunpack.c.h.b16 %v284
    %v582 = vunpack.c.l.b16 %v285
    %v583 = vunpack.c.l.b16 %v286
    %v584 = vunpack.c.h.b16 %v286
    %v585 = vunpack.c.l.b16 %v287
    %v586 = vunpack.c.l.b16 %v288
    %v587 = vunpack.c.h.b16 %v288
    %v588 = vunpack.c.l.b16 %v289
    %v589 = vunpack.c.l.b16 %v290
    %v590 = vunpack.c.h.b16 %v290
    %v591 = vunpack.c.l.b16 %v291
    %v592 = vunpack.c.l.b16 %v292
    %v593 = vunpack.c.h.b16 %v292
    %v594 = vunpack.c.l.b16 %v293
    %v595 = vunpack.c.l.b16 %v294
    %v596 = vunpack.c.h.b16 %v294
    %v597 = vunpack.c.l.b16 %v295
    %v598 = vunpack.c.l.b16 %v296
    %v599 = vunpack.c.h.b16 %v296
    %v600 = vunpack.c.l.b16 %v297
    %v601 = vunpack.c.l.b16 %v298
    %v602 = vunpack.c.h.b16 %v298
    %v603 = vunpack.c.l.b16 %v299
    %v604 = vunpack.c.l.b16 %v300
    %v605 = vunpack.c.h.b16 %v300
    %v606 = vunpack.c.l.b16 %v301
    %v607 = vunpack.c.l.b16 %v302
    %v608 = vunpack.c.h.b16 %v302
    %v609 = vunpack.c.l.b16 %v303
    %v610 = vunpack.c.l.b16 %v304
    %v611 = vunpack.c.h.b16 %v304
    %v612 = vunpack.c.l.b16 %v305
    %v613 = vunpack.c.l.b16 %v306
    %v614 = vunpack.c.h.b16 %v306
    %v615 = vunpack.c.l.b16 %v307
    %v616 = vunpack.c.l.b16 %v308
    %v617 = vunpack.c.h.b16 %v308
    %v618 = vunpack.c.l.b16 %v309
    %v619 = vunpack.c.l.b16 %v310
    %v620 = vunpack.c.h.b16 %v310
    %v621 = vunpack.c.l.b16 %v311
    %v622 = vunpack.c.l.b16 %v312
    %v623 = vunpack.c.h.b16 %v312
    %v624 = vunpack.c.l.b16 %v313
    %v625 = vunpack.c.l.b16 %v314
    %v626 = vunpack.c.h.b16 %v314
    %v627 = vunpack.c.l.b16 %v315
    %v628 = vunpack.c.l.b16 %v316
    %v629 = vunpack.c.h.b16 %v316
    %v630 = vunpack.c.l.b16 %v317
    %v631 = vunpack.c.l.b16 %v318
    %v632 = vunpack.c.h.b16 %v318
    %v633 = vunpack.c.l.b16 %v319
    %v634 = vunpack.c.l.b16 %v320
    %v635 = vunpack.c.h.b16 %v320
    %v636 = vunpack.c.l.b16 %v321
    %v637 = vunpack.c.l.b16 %v322
    %v638 = vunpack.c.h.b16 %v322
    %v639 = vunpack.c.l.b16 %v323
    %v640 = vunpack.c.l.b16 %v324
    %v641 = vunpack.c.h.b16 %v324
    %v642 = vunpack.c.l.b16 %v325
    %v643 = vunpack.c.l.b16 %v326
    %v644 = vunpack.c.h.b16 %v326
    %v645 = vunpack.c.l.b16 %v327
    %v646 = vunpack.c.l.b16 %v328
    %v647 = vunpack.c.h.b16 %v328
    %v648 = vunpack.c.l.b16 %v329
    %v649 = vunpack.c.l.b16 %v330
    %v650 = vunpack.c.h.b16 %v330
    %v651 = vunpack.c.l.b16 %v331
    %v652 = vunpack.c.l.b16 %v332
    %v653 = vunpack.c.h.b16 %v332
    %v654 = vunpack.c.l.b16 %v333
    %v655 = vunpack.c.l.b16 %v334
    %v656 = vunpack.c.h.b16 %v334
    %v657 = vunpack.c.l.b16 %v335
    %v658 = vunpack.c.l.b16 %v336
    %v659 = vunpack.c.h.b16 %v336
    %v660 = vunpack.c.l.b16 %v337
    %v661 = vunpack.c.l.b16 %v338
    %v662 = vunpack.c.h.b16 %v338
    %v663 = vunpack.c.l.b16 %v339
    %v664 = vunpack.c.l.b16 %v340
    %v665 = vunpack.c.h.b16 %v340
    %v666 = vunpack.c.l.b16 %v341
    %v667 = vunpack.c.l.b16 %v342
    %v668 = vunpack.c.h.b16 %v342
    %v669 = vunpack.c.l.b16 %v343
    %v670 = vunpack.c.l.b16 %v344
    %v671 = vunpack.c.h.b16 %v344
    %v672 = vunpack.c.l.b16 %v345
    %v673 = vunpack.c.l.b16 %v346
    %v674 = vunpack.c.h.b16 %v346
    %v675 = vunpack.c.l.b16 %v347
    %v676 = vunpack.c.l.b16 %v348
    %v677 = vunpack.c.h.b16 %v348
    %v678 = vunpack.c.l.b16 %v349
    %v679 = vunpack.c.l.b16 %v350
    %v680 = vunpack.c.h.b16 %v350
    %v681 = vunpack.c.l.b16 %v351
    %v682 = vunpack.c.l.b16 %v352
    %v683 = vunpack.c.h.b16 %v352
    %v684 = vunpack.c.l.b16 %v353
    %v685 = vunpack.c.l.b16 %v354
    %v686 = vunpack.c.h.b16 %v354
    %v687 = vunpack.c.l.b16 %v355
    %v688 = vunpack.c.l.b16 %v356
    %v689 = vunpack.c.h.b16 %v356
    %v690 = vunpack.c.l.b16 %v357
    %v691 = vunpack.c.l.b16 %v358
    %v692 = vunpack.c.h.b16 %v358
    %v693 = vunpack.c.l.b16 %v359
    %v694 = vunpack.c.l.b16 %v360
    %v695 = vunpack.c.h.b16 %v360
    %v696 = vunpack.c.l.b16 %v361
    %v697 = vunpack.c.l.b16 %v362
    %v698 = vunpack.c.h.b16 %v362
    %v699 = vunpack.c.l.b16 %v363
    %v700 = vunpack.c.l.b16 %v364
    %v701 = vunpack.c.h.b16 %v364
    %v702 = vunpack.c.l.b16 %v365
    %v703 = vpack.c.b16 %v514, %v511
    %v704 = vpack.c.b16 %v515, %v512
    %v705 = vpack.c.b16 %v516, %v513
    %v706 = vpack.c.b16 %v520, %v517
    %v707 = vpack.c.b16 %v521, %v518
    %v708 = vpack.c.b16 %v522, %v519
    %v709 = vpack.c.b16 %v526, %v523
    %v710 = vpack.c.b16 %v527, %v524
    %v711 = vpack.c.b16 %v528, %v525
    %v712 = vpack.c.b16 %v532, %v529
    %v713 = vpack.c.b16 %v533, %v530
    %v714 = vpack.c.b16 %v534, %v531
    %v715 = vpack.c.b16 %v538, %v535
    %v716 = vpack.c.b16 %v539, %v536
    %v717 = vpack.c.b16 %v540, %v537
    %v718 = vpack.c.b16 %v544, %v541
    %v719 = vpack.c.b16 %v545, %v542
    %v720 = vpack.c.b16 %v546, %v543
    %v721 = vpack.c.b16 %v550, %v547
    %v722 = vpack.c.b16 %v551, %v548
    %v723 = vpack.c.b16 %v552, %v549
    %v724 = vpack.c.b16 %v556, %v553
    %v725 = vpack.c.b16 %v557, %v554
    %v726 = vpack.c.b16 %v558, %v555
    %v727 = vpack.c.b16 %v562, %v559
    %v728 = vpack.c.b16 %v563, %v560
    %v729 = vpack.c.b16 %v564, %v561
    %v730 = vpack.c.b16 %v568, %v565
    %v731 = vpack.c.b16 %v569, %v566
    %v732 = vpack.c.b16 %v570, %v567
    %v733 = vpack.c.b16 %v574, %v571
    %v734 = vpack.c.b16 %v575, %v572
    %v735 = vpack.c.b16 %v576, %v573
    %v736 = vpack.c.b16 %v580, %v577
    %v737 = vpack.c.b16 %v581, %v578
    %v738 = vpack.c.b16 %v582, %v579
    %v739 = vpack.c.b16 %v586, %v583
    %v740 = vpack.c.b16 %v587, %v584
    %v741 = vpack.c.b16 %v588, %v585
    %v742 = vpack.c.b16 %v592, %v589
    %v743 = vpack.c.b16 %v593, %v590
    %v744 = vpack.c.b16 %v594, %v591
    %v745 = vpack.c.b16 %v598, %v595
    %v746 = vpack.c.b16 %v599, %v596
    %v747 = vpack.c.b16 %v600, %v597
    %v748 = vpack.c.b16 %v604, %v601
    %v749 = vpack.c.b16 %v605, %v602
    %v750 = vpack.c.b16 %v606, %v603
    %v751 = vpack.c.b16 %v610, %v607
    %v752 = vpack.c.b16 %v611, %v608
    %v753 = vpack.c.b16 %v612, %v609
    %v754 = vpack.c.b16 %v616, %v613
    %v755 = vpack.c.b16 %v617, %v614
    %v756 = vpack.c.b16 %v618, %v615
    %v757 = vpack.c.b16 %v622, %v619
    %v758 = vpack.c.b16 %v623, %v620
    %v759 = vpack.c.b16 %v624, %v621
    %v760 = vpack.c.b16 %v628, %v625
    %v761 = vpack.c.b16 %v629, %v626
    %v762 = vpack.c.b16 %v630, %v627
    %v763 = vpack.c.b16 %v634, %v631
    %v764 = vpack.c.b16 %v635, %v632
    %v765 = vpack.c.b16 %v636, %v633
    %v766 = vpack.c.b16 %v640, %v637
    %v767 = vpack.c.b16 %v641, %v638
    %v768 = vpack.c.b16 %v642, %v639
    %v769 = vpack.c.b16 %v646, %v643
    %v770 = vpack.c.b16 %v647, %v644
    %v771 = vpack.c.b16 %v648, %v645
    %v772 = vpack.c.b16 %v652, %v649
    %v773 = vpack.c.b16 %v653, %v650
    %v774 = vpack.c.b16 %v654, %v651
    %v775 = vpack.c.b16 %v658, %v655
    %v776 = vpack.c.b16 %v659, %v656
    %v777 = vpack.c.b16 %v660, %v657
    %v778 = vpack.c.b16 %v664, %v661
    %v779 = vpack.c.b16 %v665, %v662
    %v780 = vpack.c.b16 %v666, %v663
    %v781 = vpack.c.b16 %v670, %v667
    %v782 = vpack.c.b16 %v671, %v668
    %v783 = vpack.c.b16 %v672, %v669
    %v784 = vpack.c.b16 %v676, %v673
    %v785 = vpack.c.b16 %v677, %v674
    %v786 = vpack.c.b16 %v678, %v675
    %v787 = vpack.c.b16 %v682, %v679
    %v788 = vpack.c.b16 %v683, %v680
    %v789 = vpack.c.b16 %v684, %v681
    %v790 = vpack.c.b16 %v688, %v685
    %v791 = vpack.c.b16 %v689, %v686
    %v792 = vpack.c.b16 %v690, %v687
    %v793 = vpack.c.b16 %v694, %v691
    %v794 = vpack.c.b16 %v695, %v692
    %v795 = vpack.c.b16 %v696, %v693
    %v796 = vpack.c.b16 %v700, %v697
    %v797 = vpack.c.b16 %v701, %v698
    %v798 = vpack.c.b16 %v702, %v699
    %895 = vmatprep.subr.bf16.mxu0 %v704
    %896 = vmatpush1.bf16.msra.mxu0 %v703
    %897 = vmatprep.subr.bf16.mxu0 %v707
    %898 = vmatpush1.bf16.msra.mxu0 %v706
    %899 = vmatprep.subr.bf16.mxu0 %v710
    %900 = vmatpush1.bf16.msra.mxu0 %v709
    %901 = vmatprep.subr.bf16.mxu0 %v713
    %902 = vmatpush1.bf16.msra.mxu0 %v712
    %903 = vmatprep.subr.bf16.mxu0 %v716
    %904 = vmatpush1.bf16.msra.mxu0 %v715
    %905 = vmatprep.subr.bf16.mxu0 %v719
    %906 = vmatpush1.bf16.msra.mxu0 %v718
    %907 = vmatprep.subr.bf16.mxu0 %v722
    %908 = vmatpush1.bf16.msra.mxu0 %v721
    %909 = vmatprep.subr.bf16.mxu0 %v725
    %910 = vmatpush1.bf16.msra.mxu0 %v724
    %911 = vmatprep.subr.bf16.mxu0 %v728
    %912 = vmatpush1.bf16.msra.mxu0 %v727
    %913 = vmatprep.subr.bf16.mxu0 %v731
    %914 = vmatpush1.bf16.msra.mxu0 %v730
    %915 = vmatprep.subr.bf16.mxu0 %v734
    %916 = vmatpush1.bf16.msra.mxu0 %v733
    %917 = vmatprep.subr.bf16.mxu0 %v737
    %918 = vmatpush1.bf16.msra.mxu0 %v736
    %919 = vmatprep.subr.bf16.mxu0 %v740
    %920 = vmatpush1.bf16.msra.mxu0 %v739
    %921 = vmatprep.subr.bf16.mxu0 %v743
    %922 = vmatpush1.bf16.msra.mxu0 %v742
    %923 = vmatprep.subr.bf16.mxu0 %v746
    %924 = vmatpush1.bf16.msra.mxu0 %v745
    %925 = vmatprep.subr.bf16.mxu0 %v749
    %926 = vmatpush1.bf16.msra.mxu0 %v748
    %927 = vmatprep.mubr.bf16.mxu0 %v235
    %928 = vmatmul.mubr.bf16.gmra.mrb[0].mxu0 %v234
    %v929 = vpop.f32.mrb[0].mxu0
    %v930 = vadd.f32 %v371, %v929
    %v931 = vpop.f32.mrb[0].mxu0
    %v932 = vadd.f32 %v375, %v931
    %v933 = vpop.f32.mrb[0].mxu0
    %v934 = vadd.f32 %v371, %v933
    %v935 = vpop.f32.mrb[0].mxu0
    %v936 = vadd.f32 %v375, %v935
    %937 = vdwg.mxu0
    %938 = vmatprep.subr.bf16.mxu0 %v752
    %939 = vmatpush1.bf16.msra.mxu0 %v751
    %940 = vmatprep.subr.bf16.mxu0 %v755
    %941 = vmatpush1.bf16.msra.mxu0 %v754
    %942 = vmatprep.subr.bf16.mxu0 %v758
    %943 = vmatpush1.bf16.msra.mxu0 %v757
    %944 = vmatprep.subr.bf16.mxu0 %v761
    %945 = vmatpush1.bf16.msra.mxu0 %v760
    %946 = vmatprep.subr.bf16.mxu0 %v764
    %947 = vmatpush1.bf16.msra.mxu0 %v763
    %948 = vmatprep.subr.bf16.mxu0 %v767
    %949 = vmatpush1.bf16.msra.mxu0 %v766
    %950 = vmatprep.subr.bf16.mxu0 %v770
    %951 = vmatpush1.bf16.msra.mxu0 %v769
    %952 = vmatprep.subr.bf16.mxu0 %v773
    %953 = vmatpush1.bf16.msra.mxu0 %v772
    %954 = vmatprep.subr.bf16.mxu0 %v776
    %955 = vmatpush1.bf16.msra.mxu0 %v775
    %956 = vmatprep.subr.bf16.mxu0 %v779
    %957 = vmatpush1.bf16.msra.mxu0 %v778
    %958 = vmatprep.subr.bf16.mxu0 %v782
    %959 = vmatpush1.bf16.msra.mxu0 %v781
    %960 = vmatprep.subr.bf16.mxu0 %v785
    %961 = vmatpush1.bf16.msra.mxu0 %v784
    %962 = vmatprep.subr.bf16.mxu0 %v788
    %963 = vmatpush1.bf16.msra.mxu0 %v787
    %964 = vmatprep.subr.bf16.mxu0 %v791
    %965 = vmatpush1.bf16.msra.mxu0 %v790
    %966 = vmatprep.subr.bf16.mxu0 %v794
    %967 = vmatpush1.bf16.msra.mxu0 %v793
    %968 = vmatprep.subr.bf16.mxu0 %v797
    %969 = vmatpush1.bf16.msra.mxu0 %v796
    %970 = vmatprep.mubr.bf16.mxu0 %v237
    %971 = vmatmul.mubr.bf16.gmra.mrb[0].mxu0 %v236
    %v972 = vpop.f32.mrb[0].mxu0
    %v973 = vadd.f32 %v930, %v972
    %v974 = vpop.f32.mrb[0].mxu0
    %v975 = vadd.f32 %v932, %v974
    %v976 = vpop.f32.mrb[0].mxu0
    %v977 = vadd.f32 %v934, %v976
    %v978 = vpop.f32.mrb[0].mxu0
    %v979 = vadd.f32 %v936, %v978
    %980 = vdwg.mxu0
    %981 = vmatprep.subr.bf16.mxu0 0
    %982 = vmatpush1.bf16.msra.mxu0 %v705
    %983 = vmatprep.subr.bf16.mxu0 0
    %984 = vmatpush1.bf16.msra.mxu0 %v708
    %985 = vmatprep.subr.bf16.mxu0 0
    %986 = vmatpush1.bf16.msra.mxu0 %v711
    %987 = vmatprep.subr.bf16.mxu0 0
    %988 = vmatpush1.bf16.msra.mxu0 %v714
    %989 = vmatprep.subr.bf16.mxu0 0
    %990 = vmatpush1.bf16.msra.mxu0 %v717
    %991 = vmatprep.subr.bf16.mxu0 0
    %992 = vmatpush1.bf16.msra.mxu0 %v720
    %993 = vmatprep.subr.bf16.mxu0 0
    %994 = vmatpush1.bf16.msra.mxu0 %v723
    %995 = vmatprep.subr.bf16.mxu0 0
    %996 = vmatpush1.bf16.msra.mxu0 %v726
    %997 = vmatprep.subr.bf16.mxu0 0
    %998 = vmatpush1.bf16.msra.mxu0 %v729
    %999 = vmatprep.subr.bf16.mxu0 0
    %1000 = vmatpush1.bf16.msra.mxu0 %v732
    %1001 = vmatprep.subr.bf16.mxu0 0
    %1002 = vmatpush1.bf16.msra.mxu0 %v735
    %1003 = vmatprep.subr.bf16.mxu0 0
    %1004 = vmatpush1.bf16.msra.mxu0 %v738
    %1005 = vmatprep.subr.bf16.mxu0 0
    %1006 = vmatpush1.bf16.msra.mxu0 %v741
    %1007 = vmatprep.subr.bf16.mxu0 0
    %1008 = vmatpush1.bf16.msra.mxu0 %v744
    %1009 = vmatprep.subr.bf16.mxu0 0
    %1010 = vmatpush1.bf16.msra.mxu0 %v747
    %1011 = vmatprep.subr.bf16.mxu0 0
    %1012 = vmatpush1.bf16.msra.mxu0 %v750
    %1013 = vmatprep.mubr.bf16.mxu0 %v235
    %1014 = vmatmul.mubr.bf16.gmra.mrb[0].mxu0 %v234
    %v1015 = vpop.f32.mrb[0].mxu0
    %v1016 = vadd.f32 %v379, %v1015
    %v1017 = vpop.f32.mrb[0].mxu0
    %v1018 = vpop.f32.mrb[0].mxu0
    %v1019 = vadd.f32 %v379, %v1018
    %v1020 = vpop.f32.mrb[0].mxu0
    %1021 = vdwg.mxu0
    %1022 = vmatprep.subr.bf16.mxu0 0
    %1023 = vmatpush1.bf16.msra.mxu0 %v753
    %1024 = vmatprep.subr.bf16.mxu0 0
    %1025 = vmatpush1.bf16.msra.mxu0 %v756
    %1026 = vmatprep.subr.bf16.mxu0 0
    %1027 = vmatpush1.bf16.msra.mxu0 %v759
    %1028 = vmatprep.subr.bf16.mxu0 0
    %1029 = vmatpush1.bf16.msra.mxu0 %v762
    %1030 = vmatprep.subr.bf16.mxu0 0
    %1031 = vmatpush1.bf16.msra.mxu0 %v765
    %1032 = vmatprep.subr.bf16.mxu0 0
    %1033 = vmatpush1.bf16.msra.mxu0 %v768
    %1034 = vmatprep.subr.bf16.mxu0 0
    %1035 = vmatpush1.bf16.msra.mxu0 %v771
    %1036 = vmatprep.subr.bf16.mxu0 0
    %1037 = vmatpush1.bf16.msra.mxu0 %v774
    %1038 = vmatprep.subr.bf16.mxu0 0
    %1039 = vmatpush1.bf16.msra.mxu0 %v777
    %1040 = vmatprep.subr.bf16.mxu0 0
    %1041 = vmatpush1.bf16.msra.mxu0 %v780
    %1042 = vmatprep.subr.bf16.mxu0 0
    %1043 = vmatpush1.bf16.msra.mxu0 %v783
    %1044 = vmatprep.subr.bf16.mxu0 0
    %1045 = vmatpush1.bf16.msra.mxu0 %v786
    %1046 = vmatprep.subr.bf16.mxu0 0
    %1047 = vmatpush1.bf16.msra.mxu0 %v789
    %1048 = vmatprep.subr.bf16.mxu0 0
    %1049 = vmatpush1.bf16.msra.mxu0 %v792
    %1050 = vmatprep.subr.bf16.mxu0 0
    %1051 = vmatpush1.bf16.msra.mxu0 %v795
    %1052 = vmatprep.subr.bf16.mxu0 0
    %1053 = vmatpush1.bf16.msra.mxu0 %v798
    %1054 = vmatprep.mubr.bf16.mxu0 %v237
    %1055 = vmatmul.mubr.bf16.gmra.mrb[0].mxu0 %v236
    %v1056 = vpop.f32.mrb[0].mxu0
    %v1057 = vadd.f32 %v1016, %v1056
    %v1058 = vpop.f32.mrb[0].mxu0
    %v1059 = vpop.f32.mrb[0].mxu0
    %v1060 = vadd.f32 %v1019, %v1059
    %v1061 = vpop.f32.mrb[0].mxu0
    %1062 = vdwg.mxu0
    %v1063 = vmax.f32 %v973, 0.0
    %v1064 = vmax.f32 %v975, 0.0
    %v1065 = vmax.f32 %v1057, 0.0
    %v1066 = vmax.f32 %v977, 0.0
    %v1067 = vmax.f32 %v979, 0.0
    %v1068 = vmax.f32 %v1060, 0.0
    %v1069 = vpack.c.bf16 %v1066, %v1063
    %v1070 = vpack.c.bf16 %v1067, %v1064
    %v1071 = vpack.c.bf16 %v1068, %v1065
    %v1072 = vld [vmem:[#allocation8] sm:$0xf]
    %v1073 = vld [vmem:[#allocation8 + $0x4] sm:$0xf]
    %v1074 = vld [vmem:[#allocation8 + $0x8] sm:$0xf]
    %v1075 = vld [vmem:[#allocation8 + $0xc] sm:$0xf]
    %v1076 = vld [vmem:[#allocation8 + $0x10] sm:$0xf]
    %v1077 = vld [vmem:[#allocation8 + $0x14] sm:$0xf]
    %v1078 = vld [vmem:[#allocation8 + $0x18] sm:$0xf]
    %v1079 = vld [vmem:[#allocation8 + $0x1c] sm:$0xf]
    %v1080 = vld [vmem:[#allocation8 + $0x20] sm:$0xf]
    %v1081 = vld [vmem:[#allocation8 + $0x24] sm:$0xf]
    %v1082 = vld [vmem:[#allocation8 + $0x28] sm:$0xf]
    %v1083 = vld [vmem:[#allocation8 + $0x2c] sm:$0xf]
    %v1084 = vld [vmem:[#allocation8 + $0x30] sm:$0xf]
    %v1085 = vld [vmem:[#allocation8 + $0x34] sm:$0xf]
    %v1086 = vld [vmem:[#allocation8 + $0x38] sm:$0xf]
    %v1087 = vld [vmem:[#allocation8 + $0x3c] sm:$0xf]
    %v1088 = vld [vmem:[#allocation8 + $0x40] sm:$0xf]
    %v1089 = vld [vmem:[#allocation8 + $0x44] sm:$0xf]
    %v1090 = vld [vmem:[#allocation8 + $0x48] sm:$0xf]
    %v1091 = vld [vmem:[#allocation8 + $0x4c] sm:$0xf]
    %v1092 = vld [vmem:[#allocation8 + $0x50] sm:$0xf]
    %v1093 = vld [vmem:[#allocation8 + $0x54] sm:$0xf]
    %v1094 = vld [vmem:[#allocation8 + $0x58] sm:$0xf]
    %v1095 = vld [vmem:[#allocation8 + $0x5c] sm:$0xf]
    %v1096 = vld [vmem:[#allocation8 + $0x60] sm:$0xf]
    %v1097 = vld [vmem:[#allocation8 + $0x64] sm:$0xf]
    %v1098 = vld [vmem:[#allocation8 + $0x68] sm:$0xf]
    %v1099 = vld [vmem:[#allocation8 + $0x6c] sm:$0xf]
    %v1100 = vld [vmem:[#allocation8 + $0x70] sm:$0xf]
    %v1101 = vld [vmem:[#allocation8 + $0x74] sm:$0xf]
    %v1102 = vld [vmem:[#allocation8 + $0x78] sm:$0xf]
    %v1103 = vld [vmem:[#allocation8 + $0x7c] sm:$0xf]
    %v1104 = vld [vmem:[#allocation8 + $0x80] sm:$0xf]
    %v1105 = vld [vmem:[#allocation8 + $0x84] sm:$0xf]
    %v1106 = vld [vmem:[#allocation8 + $0x88] sm:$0xf]
    %v1107 = vld [vmem:[#allocation8 + $0x8c] sm:$0xf]
    %v1108 = vld [vmem:[#allocation8 + $0x90] sm:$0xf]
    %v1109 = vld [vmem:[#allocation8 + $0x94] sm:$0xf]
    %v1110 = vld [vmem:[#allocation8 + $0x98] sm:$0xf]
    %v1111 = vld [vmem:[#allocation8 + $0x9c] sm:$0xf]
    %v1112 = vld [vmem:[#allocation8 + $0xa0] sm:$0xf]
    %v1113 = vld [vmem:[#allocation8 + $0xa4] sm:$0xf]
    %v1114 = vld [vmem:[#allocation8 + $0xa8] sm:$0xf]
    %v1115 = vld [vmem:[#allocation8 + $0xac] sm:$0xf]
    %v1116 = vld [vmem:[#allocation8 + $0xb0] sm:$0xf]
    %v1117 = vld [vmem:[#allocation8 + $0xb4] sm:$0xf]
    %v1118 = vld [vmem:[#allocation8 + $0xb8] sm:$0xf]
    %v1119 = vld [vmem:[#allocation8 + $0xbc] sm:$0xf]
    %v1120 = vld [vmem:[%s6] sm:$0x1]
    %v1122 = vlaneseq
    %v1123 = vshrl.u32 %v1122, 7
    %v1124 = vsub.s32 0, %v1123
    %v1125 = vrot.slane %v1120, %v1124
    %v1175 = vunpack.c.l.b16 %v1072
    %v1176 = vunpack.c.l.b16 %v1073
    %v1177 = vunpack.c.l.b16 %v1074
    %v1178 = vunpack.c.l.b16 %v1075
    %v1179 = vunpack.c.l.b16 %v1076
    %v1180 = vunpack.c.l.b16 %v1077
    %v1181 = vunpack.c.l.b16 %v1078
    %v1182 = vunpack.c.l.b16 %v1079
    %v1183 = vunpack.c.l.b16 %v1080
    %v1184 = vunpack.c.l.b16 %v1081
    %v1185 = vunpack.c.l.b16 %v1082
    %v1186 = vunpack.c.l.b16 %v1083
    %v1187 = vunpack.c.l.b16 %v1084
    %v1188 = vunpack.c.l.b16 %v1085
    %v1189 = vunpack.c.l.b16 %v1086
    %v1190 = vunpack.c.l.b16 %v1087
    %v1191 = vunpack.c.l.b16 %v1088
    %v1192 = vunpack.c.l.b16 %v1089
    %v1193 = vunpack.c.l.b16 %v1090
    %v1194 = vunpack.c.l.b16 %v1091
    %v1195 = vunpack.c.l.b16 %v1092
    %v1196 = vunpack.c.l.b16 %v1093
    %v1197 = vunpack.c.l.b16 %v1094
    %v1198 = vunpack.c.l.b16 %v1095
    %v1199 = vunpack.c.l.b16 %v1096
    %v1200 = vunpack.c.l.b16 %v1097
    %v1201 = vunpack.c.l.b16 %v1098
    %v1202 = vunpack.c.l.b16 %v1099
    %v1203 = vunpack.c.l.b16 %v1100
    %v1204 = vunpack.c.l.b16 %v1101
    %v1205 = vunpack.c.l.b16 %v1102
    %v1206 = vunpack.c.l.b16 %v1103
    %v1207 = vunpack.c.l.b16 %v1104
    %v1208 = vunpack.c.l.b16 %v1105
    %v1209 = vunpack.c.l.b16 %v1106
    %v1210 = vunpack.c.l.b16 %v1107
    %v1211 = vunpack.c.l.b16 %v1108
    %v1212 = vunpack.c.l.b16 %v1109
    %v1213 = vunpack.c.l.b16 %v1110
    %v1214 = vunpack.c.l.b16 %v1111
    %v1215 = vunpack.c.l.b16 %v1112
    %v1216 = vunpack.c.l.b16 %v1113
    %v1217 = vunpack.c.l.b16 %v1114
    %v1218 = vunpack.c.l.b16 %v1115
    %v1219 = vunpack.c.l.b16 %v1116
    %v1220 = vunpack.c.l.b16 %v1117
    %v1221 = vunpack.c.l.b16 %v1118
    %v1222 = vunpack.c.l.b16 %v1119
    %v1223 = vpack.c.b16 %v1176, %v1175
    %v1224 = vpack.c.b16 %v1178, %v1177
    %v1225 = vpack.c.b16 %v1180, %v1179
    %v1226 = vpack.c.b16 %v1182, %v1181
    %v1227 = vpack.c.b16 %v1184, %v1183
    %v1228 = vpack.c.b16 %v1186, %v1185
    %v1229 = vpack.c.b16 %v1188, %v1187
    %v1230 = vpack.c.b16 %v1190, %v1189
    %v1231 = vpack.c.b16 %v1192, %v1191
    %v1232 = vpack.c.b16 %v1194, %v1193
    %v1233 = vpack.c.b16 %v1196, %v1195
    %v1234 = vpack.c.b16 %v1198, %v1197
    %v1235 = vpack.c.b16 %v1200, %v1199
    %v1236 = vpack.c.b16 %v1202, %v1201
    %v1237 = vpack.c.b16 %v1204, %v1203
    %v1238 = vpack.c.b16 %v1206, %v1205
    %v1239 = vpack.c.b16 %v1208, %v1207
    %v1240 = vpack.c.b16 %v1210, %v1209
    %v1241 = vpack.c.b16 %v1212, %v1211
    %v1242 = vpack.c.b16 %v1214, %v1213
    %v1243 = vpack.c.b16 %v1216, %v1215
    %v1244 = vpack.c.b16 %v1218, %v1217
    %v1245 = vpack.c.b16 %v1220, %v1219
    %v1246 = vpack.c.b16 %v1222, %v1221
    %1271 = vmatprep.subr.bf16.mxu0 0
    %1272 = vmatpush1.bf16.msra.mxu0 %v1223
    %1273 = vmatprep.subr.bf16.mxu0 0
    %1274 = vmatpush1.bf16.msra.mxu0 %v1224
    %1275 = vmatprep.subr.bf16.mxu0 0
    %1276 = vmatpush1.bf16.msra.mxu0 %v1225
    %1277 = vmatprep.subr.bf16.mxu0 0
    %1278 = vmatpush1.bf16.msra.mxu0 %v1226
    %1279 = vmatprep.subr.bf16.mxu0 0
    %1280 = vmatpush1.bf16.msra.mxu0 %v1227
    %1281 = vmatprep.subr.bf16.mxu0 0
    %1282 = vmatpush1.bf16.msra.mxu0 %v1228
    %1283 = vmatprep.subr.bf16.mxu0 0
    %1284 = vmatpush1.bf16.msra.mxu0 %v1229
    %1285 = vmatprep.subr.bf16.mxu0 0
    %1286 = vmatpush1.bf16.msra.mxu0 %v1230
    %1287 = vmatprep.subr.bf16.mxu0 0
    %1288 = vmatpush1.bf16.msra.mxu0 %v1231
    %1289 = vmatprep.subr.bf16.mxu0 0
    %1290 = vmatpush1.bf16.msra.mxu0 %v1232
    %1291 = vmatprep.subr.bf16.mxu0 0
    %1292 = vmatpush1.bf16.msra.mxu0 %v1233
    %1293 = vmatprep.subr.bf16.mxu0 0
    %1294 = vmatpush1.bf16.msra.mxu0 %v1234
    %1295 = vmatprep.subr.bf16.mxu0 0
    %1296 = vmatpush1.bf16.msra.mxu0 %v1235
    %1297 = vmatprep.subr.bf16.mxu0 0
    %1298 = vmatpush1.bf16.msra.mxu0 %v1236
    %1299 = vmatprep.subr.bf16.mxu0 0
    %1300 = vmatpush1.bf16.msra.mxu0 %v1237
    %1301 = vmatprep.subr.bf16.mxu0 0
    %1302 = vmatpush1.bf16.msra.mxu0 %v1238
    %1303 = vmatprep.mubr.bf16.mxu0 %v1070
    %1304 = vmatmul.mubr.bf16.gmra.mrb[0].mxu0 %v1069
    %v1305 = vpop.f32.mrb[0].mxu0
    %v1306 = vadd.f32 %v1125, %v1305
    %v1307 = vpop.f32.mrb[0].mxu0
    %v1308 = vpop.f32.mrb[0].mxu0
    %v1309 = vadd.f32 %v1125, %v1308
    %v1310 = vpop.f32.mrb[0].mxu0
    %1311 = vdwg.mxu0
    %1312 = vmatprep.subr.bf16.mxu0 0
    %1313 = vmatpush1.bf16.msra.mxu0 %v1239
    %1314 = vmatprep.subr.bf16.mxu0 0
    %1315 = vmatpush1.bf16.msra.mxu0 %v1240
    %1316 = vmatprep.subr.bf16.mxu0 0
    %1317 = vmatpush1.bf16.msra.mxu0 %v1241
    %1318 = vmatprep.subr.bf16.mxu0 0
    %1319 = vmatpush1.bf16.msra.mxu0 %v1242
    %1320 = vmatprep.subr.bf16.mxu0 0
    %1321 = vmatpush1.bf16.msra.mxu0 %v1243
    %1322 = vmatprep.subr.bf16.mxu0 0
    %1323 = vmatpush1.bf16.msra.mxu0 %v1244
    %1324 = vmatprep.subr.bf16.mxu0 0
    %1325 = vmatpush1.bf16.msra.mxu0 %v1245
    %1326 = vmatprep.subr.bf16.mxu0 0
    %1327 = vmatpush1.bf16.msra.mxu0 %v1246
    %1328 = vmatprep.subr.bf16.mxu0 0
    %1329 = vmatpush1.bf16.msra.mxu0 0
    %1330 = vmatprep.subr.bf16.mxu0 0
    %1331 = vmatpush1.bf16.msra.mxu0 0
    %1332 = vmatprep.subr.bf16.mxu0 0
    %1333 = vmatpush1.bf16.msra.mxu0 0
    %1334 = vmatprep.subr.bf16.mxu0 0
    %1335 = vmatpush1.bf16.msra.mxu0 0
    %1336 = vmatprep.subr.bf16.mxu0 0
    %1337 = vmatpush1.bf16.msra.mxu0 0
    %1338 = vmatprep.subr.bf16.mxu0 0
    %1339 = vmatpush1.bf16.msra.mxu0 0
    %1340 = vmatprep.subr.bf16.mxu0 0
    %1341 = vmatpush1.bf16.msra.mxu0 0
    %1342 = vmatprep.subr.bf16.mxu0 0
    %1343 = vmatpush1.bf16.msra.mxu0 0
    %1344 = vmatprep.mubr.bf16.mxu0 0
    %1345 = vmatmul.mubr.bf16.gmra.mrb[0].mxu0 %v1071
    %v1346 = vpop.f32.mrb[0].mxu0
    %v1347 = vadd.f32 %v1306, %v1346
    %v1348 = vpop.f32.mrb[0].mxu0
    %v1349 = vpop.f32.mrb[0].mxu0
    %v1350 = vadd.f32 %v1309, %v1349
    %v1351 = vpop.f32.mrb[0].mxu0
    %1352 = vdwg.mxu0
    %v1353 = vtanh.pop %v1347
    %v1354 = vtanh.pop %v1350
    %v1355 = vmul.f32 %v1353, 2.0
    %v1356 = vmul.f32 %v1354, 2.0
    %1357 = vst [vmem:[#allocation10] sm:$0xff] %v1355
    %1358 = vst [vmem:[#allocation10 + $0x8] sm:$0xff] %v1356
    // Predicated region
    $region46: #{tpu_custom_call.1} parent=1 // pred_check
      _
    $region47: #{tpu_custom_call.1} parent=1 // pred_check_branch
      %1360 = sbr.rel (0) target = $region49
    $region48: #{tpu_custom_call.1} parent=1 // pred_region
      %s1362 = ssub.s32 256, 256
      %1363 = vsyncadd [#allocation4], %s1362
      %s1364 = sshll.u32 [#allocation10], 4
      %s1365 = int_to_ptr.vmem [resolvable:$true] %s1364
      %1370 = dma.vmem_to_hbm [thread:$0]  %s1365, 256, %s7, [#allocation4], 128, 128, 8
    $region49: #{tpu_custom_call.1} parent=1 // pred_fallthru
      _
    // Predicated region
    $region50: #{tpu_custom_call.1} parent=1 // pred_check
      _
    $region51: #{tpu_custom_call.1} parent=1 // pred_check_branch
      %1372 = sbr.rel (0) target = $region53
    $region52: #{tpu_custom_call.1} parent=1 // pred_region
      %1373 = dma.done [#allocation4], 256
    $region53: #{tpu_custom_call.1} parent=1 // pred_fallthru
      _
    %1374 = vsyncpa [#allocation3], 1
    %1375 = vsyncpa [#allocation6], 1
    %1376 = vsyncpa [#allocation9], 1
    %1377 = vsyncpa [#allocation4], 1

</llo_original>
